<compile_context>
chip_gen: v7x
topology: tpu7x:2x2x1
jax: 0.10.0
libtpu: 0.0.40
codegen_flags: <defaults>
</compile_context>

<pallas_src>
import functools
import math

import jax
import jax.numpy as jnp
from jax.experimental import pallas as pl
from jax.experimental.pallas import tpu as pltpu


def _sine_pos_kernel(xe_ref, const_ref, out_ref, *, num_packed):
    """xe_ref:    (B, tG, R) f32 -- cumsum positions, R per output lane-row
       const_ref: (R+2, W)  f32 -- rows 0..R-1: 0/1 lane selectors
                                   row R:   1/dim_t tiled R times
                                   row R+1: sin phase offset (0 | pi/2) tiled R times
       out_ref:   (B, tG, W) f32 -- W = R*D, multiple of 128 -> unmasked stores
    """
    R = num_packed
    xe = xe_ref[...]                                   # (B, tG, R)
    c = const_ref[...]                                 # (R+2, W)

    # Broadcast x_embed across its D feature lanes with precomputed 0/1 selectors
    # (pure VPU lane-broadcast + blend; no MXU, no reshape/relayout, no iota).
    xe_row = xe[:, :, 0:1] * c[0, :]                   # (B, tG, W)
    for r in range(1, R):
        xe_row = xe_row + xe[:, :, r:r + 1] * c[r, :]

    # cos(x) = sin(x + pi/2): a single EUP transcendental per element; 1/dim_t multiply
    # keeps the lone EUP slot free of divides.
    out_ref[...] = jnp.sin(xe_row * c[R, :] + c[R + 1, :])


def _pick_seq_tile(G, bytes_per_row, budget_bytes=2 * 1024 * 1024):
    """Largest multiple-of-8 divisor of G whose (B, tile, W) f32 block fits the budget.
    Falls back to the full axis (block dim == array dim is always a legal BlockSpec)."""
    limit = max(1, budget_bytes // max(bytes_per_row, 1))
    best = None
    for t in range(8, min(G, limit) + 1, 8):
        if G % t == 0:
            best = t
    return best if best is not None else G


def position_embedding_sine(x, mask, *, num_pos_feats=64, temperature=10000,
                            normalize=False, scale=None):
    """x: unused by the math (as in the PyTorch module); mask: (B, L) bool, True = padded.

    Returns pos: (B, L, num_pos_feats) float32.
    """
    if scale is not None and normalize is False:
        raise ValueError("normalize should be True if scale is passed")
    if scale is None:
        scale = 2 * math.pi
    del x  # only the padding mask participates in the computation
    D = int(num_pos_feats)
    assert D % 2 == 0, "num_pos_feats must be even"
    B, L = mask.shape

    # ---- wrapper glue: (B, L)-sized cumsum + normalize (review items 1b / 6 / 10) -----
    not_mask = jnp.logical_not(mask).astype(jnp.float32)
    x_embed = jnp.cumsum(not_mask, axis=1)                        # exact for L < 2^24
    if normalize:
        eps = 1e-6
        x_embed = x_embed / (x_embed[:, -1:] + eps) * scale       # normalizer = last element

    # ---- lane-dense packing: R sequence positions per W = R*D lane row ----------------
    W = D * 128 // math.gcd(D, 128)               # lcm(D, 128): always a multiple of 128
    R = W // D
    G = -(-L // R)                                # packed lane rows per batch
    L_pad = G * R
    if L_pad != L:
        # TODO(synk): padded tail rows are computed and sliced off; fine for rare odd L.
        x_embed = jnp.pad(x_embed, ((0, 0), (0, L_pad - L)))

    # ---- static constants (precomputed once; single (R+2, W) input DMA) ---------------
    d = jnp.arange(D, dtype=jnp.float32)
    dim_t = jnp.float32(temperature) ** (2.0 * jnp.floor(d / 2.0) / D)
    inv_dim_t = 1.0 / dim_t                                                    # (D,)
    offset = jnp.where(jnp.arange(D) % 2 == 1,
                       jnp.float32(math.pi / 2.0), jnp.float32(0.0))           # (D,)
    sel = (jnp.arange(W)[None, :] // D == jnp.arange(R)[:, None]).astype(jnp.float32)  # (R, W)
    const = jnp.concatenate(
        [sel, jnp.tile(inv_dim_t, R)[None, :], jnp.tile(offset, R)[None, :]], axis=0)  # (R+2, W)

    # ---- grid over sequence tiles; full batch per block -------------------------------
    tile_g = _pick_seq_tile(G, bytes_per_row=B * W * 4)
    grid = (G // tile_g,)

    kernel = functools.partial(_sine_pos_kernel, num_packed=R)
    out = pl.pallas_call(
        kernel,
        out_shape=jax.ShapeDtypeStruct((B, G, W), jnp.float32),
        grid=grid,
        in_specs=[
            pl.BlockSpec((B, tile_g, R), lambda i: (0, i, 0)),       # packed x_embed (tiny)
            pl.BlockSpec((R + 2, W), lambda i: (0, 0)),              # constants (loaded once)
        ],
        out_specs=pl.BlockSpec((B, tile_g, W), lambda i: (0, i, 0)),  # lane-dense output
        compiler_params=pltpu.CompilerParams(
            dimension_semantics=("parallel",)),                       # v7x: 2 TCs split tiles
    )(x_embed.reshape(B, G, R), const)

    pos = out.reshape(B, L_pad, D)   # metadata-only: (B, G, R*D) row-major == (B, L_pad, D)
    if L_pad != L:
        pos = pos[:, :L]
    return pos


if __name__ == "__main__":
    key = jax.random.PRNGKey(0)

    B, L, C = 2, 16, 32      # batch, sequence length, hidden width of x (x is unused)
    D = 64                   # num_pos_feats (module default)

    x = jax.random.normal(key, (B, L, C), dtype=jnp.float32)
    # padding mask as in DETR's NestedTensor: True = padded position
    lengths = jnp.array([L, 11], dtype=jnp.int32)
    mask = jnp.arange(L)[None, :] >= lengths[:, None]               # (B, L) bool

    def reference(mask, D, temperature=10000, normalize=False, scale=2 * math.pi):
        # pure-JAX mirror of the PyTorch forward
        not_mask = (~mask).astype(jnp.float32)
        x_embed = jnp.cumsum(not_mask, axis=1)
        if normalize:
            x_embed = x_embed / (x_embed[:, -1:] + 1e-6) * scale
        dim_t = jnp.arange(D, dtype=jnp.float32)
        dim_t = temperature ** (2.0 * jnp.floor(dim_t / 2.0) / D)
        pos_x = x_embed[:, :, None] / dim_t
        Bq, Lq = mask.shape
        return jnp.stack((jnp.sin(pos_x[:, :, 0::2]), jnp.cos(pos_x[:, :, 1::2])),
                         axis=3).reshape(Bq, Lq, D)

    for normalize in (False, True):
        pos = position_embedding_sine(x, mask, num_pos_feats=D, normalize=normalize)
        pos = jax.block_until_ready(pos)
        ref = reference(mask, D, normalize=normalize)
        assert pos.shape == (B, L, D)
        assert jnp.allclose(pos, ref, atol=1e-4, rtol=1e-4), \
            f"mismatch vs reference (normalize={normalize})"

    print("KERNEL_OK")
</pallas_src>

<mosaic_0001>
module attributes {stable_mosaic.version = 11 : i64} {
  func.func @_sine_pos_kernel(%arg0: i32, %arg1: memref<2x8x2xf32, #tpu.memory_space<vmem>>, %arg2: memref<4x128xf32, #tpu.memory_space<vmem>>, %arg3: memref<2x8x128xf32, #tpu.memory_space<vmem>>) attributes {dimension_semantics = [#tpu.dimension_semantics<parallel>], iteration_bounds = array<i64: 1>, scalar_prefetch = 0 : i64, scratch_operands = 0 : i64, tpu.core_type = #tpu.core_type<tc>, window_params = [{transform_indices = @transform_0, window_bounds = array<i64: 2, 8, 2>}, {pipeline_mode = #tpu.pipeline_mode<synchronous>, transform_indices = @transform_1, window_bounds = array<i64: 4, 128>}, {transform_indices = @transform_2, window_bounds = array<i64: 2, 8, 128>}]} {
    %c0 = arith.constant 0 : index
    %c0_0 = arith.constant 0 : index
    %c0_1 = arith.constant 0 : index
    %0 = vector.load %arg1[%c0, %c0_0, %c0_1] : memref<2x8x2xf32, #tpu.memory_space<vmem>>, vector<2x8x2xf32>
    %c0_2 = arith.constant 0 : index
    %c0_3 = arith.constant 0 : index
    %1 = vector.load %arg2[%c0_2, %c0_3] : memref<4x128xf32, #tpu.memory_space<vmem>>, vector<4x128xf32>
    %2 = vector.extract_strided_slice %0 {offsets = [0, 0, 0], sizes = [2, 8, 1], strides = [1, 1, 1]} : vector<2x8x2xf32> to vector<2x8x1xf32>
    %3 = vector.extract_strided_slice %1 {offsets = [0, 0], sizes = [1, 128], strides = [1, 1]} : vector<4x128xf32> to vector<1x128xf32>
    %4 = vector.shape_cast %3 : vector<1x128xf32> to vector<128xf32>
    %5 = vector.shape_cast %4 : vector<128xf32> to vector<1x1x128xf32>
    %6 = vector.broadcast %2 : vector<2x8x1xf32> to vector<2x8x128xf32>
    %7 = vector.broadcast %5 : vector<1x1x128xf32> to vector<2x8x128xf32>
    %8 = arith.mulf %6, %7 : vector<2x8x128xf32>
    %9 = vector.extract_strided_slice %0 {offsets = [0, 0, 1], sizes = [2, 8, 1], strides = [1, 1, 1]} : vector<2x8x2xf32> to vector<2x8x1xf32>
    %10 = vector.extract_strided_slice %1 {offsets = [1, 0], sizes = [1, 128], strides = [1, 1]} : vector<4x128xf32> to vector<1x128xf32>
    %11 = vector.shape_cast %10 : vector<1x128xf32> to vector<128xf32>
    %12 = vector.shape_cast %11 : vector<128xf32> to vector<1x1x128xf32>
    %13 = vector.broadcast %9 : vector<2x8x1xf32> to vector<2x8x128xf32>
    %14 = vector.broadcast %12 : vector<1x1x128xf32> to vector<2x8x128xf32>
    %15 = arith.mulf %13, %14 : vector<2x8x128xf32>
    %16 = arith.addf %8, %15 : vector<2x8x128xf32>
    %17 = vector.extract_strided_slice %1 {offsets = [2, 0], sizes = [1, 128], strides = [1, 1]} : vector<4x128xf32> to vector<1x128xf32>
    %18 = vector.shape_cast %17 : vector<1x128xf32> to vector<128xf32>
    %19 = vector.shape_cast %18 : vector<128xf32> to vector<1x1x128xf32>
    %20 = vector.broadcast %19 : vector<1x1x128xf32> to vector<2x8x128xf32>
    %21 = arith.mulf %16, %20 : vector<2x8x128xf32>
    %22 = vector.extract_strided_slice %1 {offsets = [3, 0], sizes = [1, 128], strides = [1, 1]} : vector<4x128xf32> to vector<1x128xf32>
    %23 = vector.shape_cast %22 : vector<1x128xf32> to vector<128xf32>
    %24 = vector.shape_cast %23 : vector<128xf32> to vector<1x1x128xf32>
    %25 = vector.broadcast %24 : vector<1x1x128xf32> to vector<2x8x128xf32>
    %26 = arith.addf %21, %25 : vector<2x8x128xf32>
    %27 = math.sin %26 : vector<2x8x128xf32>
    %c0_4 = arith.constant 0 : index
    %c0_5 = arith.constant 0 : index
    %c0_6 = arith.constant 0 : index
    %28 = vector.load %arg3[%c0_4, %c0_5, %c0_6] : memref<2x8x128xf32, #tpu.memory_space<vmem>>, vector<2x8x128xf32>
    tpu.vector_store %arg3[%c0_4, %c0_5, %c0_6], %27 {strides = array<i32>} : memref<2x8x128xf32, #tpu.memory_space<vmem>>, vector<2x8x128xf32>,
    return
  }
  func.func @transform_0(%arg0: i32) -> (i32, i32, i32) {
    %c0_i32 = arith.constant 0 : i32
    %c0_i32_0 = arith.constant 0 : i32
    %c0_i32_1 = arith.constant 0 : i32
    return %c0_i32, %arg0, %c0_i32_0 : i32, i32, i32
  }
  func.func @transform_1(%arg0: i32) -> (i32, i32) {
    %c0_i32 = arith.constant 0 : i32
    %c0_i32_0 = arith.constant 0 : i32
    %c0_i32_1 = arith.constant 0 : i32
    return %c0_i32, %c0_i32_0 : i32, i32
  }
  func.func @transform_2(%arg0: i32) -> (i32, i32, i32) {
    %c0_i32 = arith.constant 0 : i32
    %c0_i32_0 = arith.constant 0 : i32
    %c0_i32_1 = arith.constant 0 : i32
    return %c0_i32, %arg0, %c0_i32_0 : i32, i32, i32
  }
}

</mosaic_0001>

<llo_original>
// kernel: tpu_custom_call.1
$region0: #{tpu_custom_call.1}
  #allocation0 [shape = 'u32[]', space=smem, size = 0x4, offset = 0x4, fixed_abs, tag = 'smem constant byte address 0x4 - core index']
  #allocation1 [shape = 'u32[144,128]{1,0:T(1,128)}', space=vmem, size = 0x12000, scoped, tag = 'internal scratch']
  %s0 = inlined_call_operand.vmem [shape: f32[2,8,2], index: 0, kind: input, shape index: {}]
  %s1 = inlined_call_operand.vmem [shape: f32[4,128], index: 1, kind: input, shape index: {}]
  %s2 = inlined_call_operand.hbm [shape: f32[2,8,128], index: 2, kind: output, shape index: {}]
  %s3 = sld [smem:[#allocation0]]
  $region18: #{tpu_custom_call.1} parent=0
    _
  %s5 = ssub.s32 1, %s3
  %s6 = scalar_select 0, %s5, %s3
  $region1: #{tpu_custom_call.1} parent=0
    #allocation2 [shape = 'u8[8192]{0}', space=vmem, size = 0x2000, scoped, tag = 'output window, operand 0, single buffered']
    #allocation3 [shape = 's32[1]{0}', space=sflag, size = 0x4, scoped, tag = 'scoped memory for tpu_custom_call.1']
    %7 = vsyncpa [#allocation3], 0
    // Predicated region
    $region2: #{tpu_custom_call.1} parent=1 // pred_check
      _
    $region3: #{tpu_custom_call.1} parent=1 // pred_check_branch
      %9 = sbr.rel (0) target = $region5
    $region4: #{tpu_custom_call.1} parent=1 // pred_region
      _
    $region5: #{tpu_custom_call.1} parent=1 // pred_fallthru
      _
    // Predicated region
    $region6: #{tpu_custom_call.1} parent=1 // pred_check
      _
    $region7: #{tpu_custom_call.1} parent=1 // pred_check_branch
      %11 = sbr.rel (0) target = $region9
    $region8: #{tpu_custom_call.1} parent=1 // pred_region
      _
    $region9: #{tpu_custom_call.1} parent=1 // pred_fallthru
      _
    %v12 = vld [vmem:[%s0] sm:$0xff]
    %v13 = vld [vmem:[%s0 + $0x8] sm:$0xff]
    %v14 = vld [vmem:[%s1] sm:$0xf]
    %16 = vset.pattern.permute.xlu0 0
    %17 = vperm.xlu0 %16, %v12
    %v18 = vpop.permute.xlu0 %17
    %21 = vset.pattern.permute.xlu0 0
    %22 = vperm.xlu0 %21, %v13
    %v23 = vpop.permute.xlu0 %22
    %v25 = vlaneseq
    %v26 = vshrl.u32 %v25, 7
    %v27 = vsub.s32 0, %v26
    %v28 = vrot.slane %v14, %v27
    %v29 = vmul.f32 %v18, %v28
    %v30 = vmul.f32 %v23, %v28
    %31 = vset.pattern.permute.xlu0 1
    %32 = vperm.xlu0 %31, %v12
    %v33 = vpop.permute.xlu0 %32
    %35 = vset.pattern.permute.xlu0 1
    %36 = vperm.xlu0 %35, %v13
    %v37 = vpop.permute.xlu0 %36
    %v39 = vlaneseq
    %v40 = vshrl.u32 %v39, 7
    %v41 = vsub.s32 1, %v40
    %v42 = vrot.slane %v14, %v41
    %v43 = vmul.f32 %v33, %v42
    %v44 = vmul.f32 %v37, %v42
    %v45 = vadd.f32 %v29, %v43
    %v46 = vadd.f32 %v30, %v44
    %v47 = vlaneseq
    %v48 = vshrl.u32 %v47, 7
    %v49 = vsub.s32 2, %v48
    %v50 = vrot.slane %v14, %v49
    %v51 = vmul.f32 %v45, %v50
    %v52 = vmul.f32 %v46, %v50
    %v53 = vlaneseq
    %v54 = vshrl.u32 %v53, 7
    %v55 = vsub.s32 3, %v54
    %v56 = vrot.slane %v14, %v55
    %v57 = vadd.f32 %v51, %v56
    %v58 = vadd.f32 %v52, %v56
    %v59 = vand.u32 2147483647, %v57
    %vm60 = vcmp.le.f32.partialorder %v59, 0.7853982
    %vm61 = vcmp.lt.s32.totalorder %v57, 0
    %v62 = vand.u32 %v57, 2139095040
    %v63 = vshrl.u32 %v62, 23
    %v64 = vsub.s32 %v63, 127
    %v65 = vand.u32 2147483647, %v57
    %v66 = vand.u32 %v65, 8388607
    %v67 = vor.u32 %v66, 8388608
    %v68 = vsub.s32 0, %v67
    %v69 = vadd.s32 %v64, 1
    %vm70 = vcmp.gt.s32.totalorder %v69, 0
    %v71 = vsel %vm70, %v69, 0
    %v72 = vshrl.u32 %v71, 5
    %v73 = vand.u32 %v71, 31
    %v74 = vsub.s32 32, %v73
    %v75 = vshrl.u32 683565275, %v74
    %v76 = vshll.u32 683565275, %v73
    %v77 = vshrl.u32 2475754826, %v74
    %v78 = vor.u32 %v76, %v77
    %v79 = vshll.u32 2475754826, %v73
    %v80 = vshrl.u32 2131351028, %v74
    %v81 = vor.u32 %v79, %v80
    %v82 = vshll.u32 2131351028, %v73
    %v83 = vshrl.u32 2102212464, %v74
    %v84 = vor.u32 %v82, %v83
    %v85 = vshll.u32 2102212464, %v73
    %v86 = vshrl.u32 920167782, %v74
    %v87 = vor.u32 %v85, %v86
    %v88 = vshll.u32 920167782, %v73
    %v89 = vshrl.u32 1326507024, %v74
    %v90 = vor.u32 %v88, %v89
    %vm91 = vcmp.lt.s32.totalorder %v72, 1
    %vm92 = vcmp.lt.s32.totalorder %v72, 2
    %vm93 = vcmp.lt.s32.totalorder %v72, 3
    %vm94 = vcmp.lt.s32.totalorder %v72, 4
    %v95 = vsel %vm91, %v75, %v78
    %v96 = vsel %vm94, %v84, 2102212464
    %v97 = vsel %vm93, %v81, %v96
    %v98 = vsel %vm92, %v95, %v97
    %v99 = vsel %vm91, %v78, %v81
    %v100 = vsel %vm94, %v87, 920167782
    %v101 = vsel %vm93, %v84, %v100
    %v102 = vsel %vm92, %v99, %v101
    %v103 = vsel %vm91, %v81, %v84
    %v104 = vsel %vm94, %v90, 1326507024
    %v105 = vsel %vm93, %v87, %v104
    %v106 = vsel %vm92, %v103, %v105
    %v107 = vshll.u32 %v67, 8
    %v108 = vmul.u32.u64.compose %v107, %v106
    %v109 = vextract.low.u32 %v108
    %v110 = vextract.high.u32 %v108
    %v111 = vmul.u32.u64.compose %v107, %v102
    %v112 = vextract.low.u32 %v111
    %v113 = vextract.high.u32 %v111
    %v114 = vmul.u32 %v107, %v98
    %v115 = vadd.s32 %v110, %v112
    %vm116 = vc.u32 %v110, %v112
    %v117 = vadd.s32 %v113, 1
    %v118 = vsel %vm116, %v117, %v113
    %v119 = vadd.s32 %v114, %v118
    %v120 = vadd.s32 %v119, 536870912
    %v121 = vshrl.u32 %v120, 30
    %v122 = vshll.u32 %v121, 30
    %v123 = vsub.s32 %v119, %v122
    %vm124 = vcmp.lt.s32.totalorder %v123, 0
    %v125 = vsub.s32 0, %v123
    %v126 = vsel %vm124, %v125, %v123
    %v127 = vclz %v126
    %v128 = vsub.s32 %v127, 2
    %vm129 = vcmp.gt.s32.totalorder 0, %v128
    %v130 = vsel %vm129, 0, %v128
    %v131 = vsub.s32 32, %v130
    %v132 = vshll.u32 %v123, %v130
    %v133 = vshrl.u32 %v115, %v131
    %v134 = vor.u32 %v132, %v133
    %v135 = vsub.s32 4294967266, %v130
    %v136 = vadd.s32 %v135, 127
    %v137 = vshll.u32 %v136, 23
    %v138 = vor.u32 4788187, %v137
    %v139 = vand.u32 2147483647, %v138
    %v141 = vcvt.s32.f32 %v134
    %v142 = vmul.f32 %v141, %v139
    %v143 = vxor.u32 %v142, 2147483648
    %v144 = vsel %vm61, %v143, %v142
    %v145 = vsub.s32 4, %v121
    %v146 = vsel %vm61, %v145, %v121
    %v147 = vsel %vm60, %v57, %v144
    %v148 = vsel %vm60, 0, %v146
    %v149 = vcosq.f32.pop %v147
    %v150 = vsinq.f32.pop %v147
    %vm151 = vweird.f32 %v57
    %v152 = vadd.s32 %v148, 3
    %v153 = vand.u32 %v152, 3
    %vm154 = vcmp.lt.s32.totalorder %v153, 2
    %vm155 = vcmp.eq.s32.totalorder %v153, 0
    %v156 = vxor.u32 %v150, 2147483648
    %v157 = vsel %vm155, %v149, %v156
    %vm158 = vcmp.eq.s32.totalorder %v153, 2
    %v159 = vxor.u32 %v149, 2147483648
    %v160 = vsel %vm158, %v159, %v150
    %v161 = vsel %vm154, %v157, %v160
    %v162 = vsel %vm151, nan, %v161
    %v163 = vand.u32 2147483647, %v58
    %vm164 = vcmp.le.f32.partialorder %v163, 0.7853982
    %vm165 = vcmp.lt.s32.totalorder %v58, 0
    %v166 = vand.u32 %v58, 2139095040
    %v167 = vshrl.u32 %v166, 23
    %v168 = vsub.s32 %v167, 127
    %v169 = vand.u32 2147483647, %v58
    %v170 = vand.u32 %v169, 8388607
    %v171 = vor.u32 %v170, 8388608
    %v172 = vsub.s32 0, %v171
    %v173 = vadd.s32 %v168, 1
    %vm174 = vcmp.gt.s32.totalorder %v173, 0
    %v175 = vsel %vm174, %v173, 0
    %v176 = vshrl.u32 %v175, 5
    %v177 = vand.u32 %v175, 31
    %v178 = vsub.s32 32, %v177
    %v179 = vshrl.u32 683565275, %v178
    %v180 = vshll.u32 683565275, %v177
    %v181 = vshrl.u32 2475754826, %v178
    %v182 = vor.u32 %v180, %v181
    %v183 = vshll.u32 2475754826, %v177
    %v184 = vshrl.u32 2131351028, %v178
    %v185 = vor.u32 %v183, %v184
    %v186 = vshll.u32 2131351028, %v177
    %v187 = vshrl.u32 2102212464, %v178
    %v188 = vor.u32 %v186, %v187
    %v189 = vshll.u32 2102212464, %v177
    %v190 = vshrl.u32 920167782, %v178
    %v191 = vor.u32 %v189, %v190
    %v192 = vshll.u32 920167782, %v177
    %v193 = vshrl.u32 1326507024, %v178
    %v194 = vor.u32 %v192, %v193
    %vm195 = vcmp.lt.s32.totalorder %v176, 1
    %vm196 = vcmp.lt.s32.totalorder %v176, 2
    %vm197 = vcmp.lt.s32.totalorder %v176, 3
    %vm198 = vcmp.lt.s32.totalorder %v176, 4
    %v199 = vsel %vm195, %v179, %v182
    %v200 = vsel %vm198, %v188, 2102212464
    %v201 = vsel %vm197, %v185, %v200
    %v202 = vsel %vm196, %v199, %v201
    %v203 = vsel %vm195, %v182, %v185
    %v204 = vsel %vm198, %v191, 920167782
    %v205 = vsel %vm197, %v188, %v204
    %v206 = vsel %vm196, %v203, %v205
    %v207 = vsel %vm195, %v185, %v188
    %v208 = vsel %vm198, %v194, 1326507024
    %v209 = vsel %vm197, %v191, %v208
    %v210 = vsel %vm196, %v207, %v209
    %v211 = vshll.u32 %v171, 8
    %v212 = vmul.u32.u64.compose %v211, %v210
    %v213 = vextract.low.u32 %v212
    %v214 = vextract.high.u32 %v212
    %v215 = vmul.u32.u64.compose %v211, %v206
    %v216 = vextract.low.u32 %v215
    %v217 = vextract.high.u32 %v215
    %v218 = vmul.u32 %v211, %v202
    %v219 = vadd.s32 %v214, %v216
    %vm220 = vc.u32 %v214, %v216
    %v221 = vadd.s32 %v217, 1
    %v222 = vsel %vm220, %v221, %v217
    %v223 = vadd.s32 %v218, %v222
    %v224 = vadd.s32 %v223, 536870912
    %v225 = vshrl.u32 %v224, 30
    %v226 = vshll.u32 %v225, 30
    %v227 = vsub.s32 %v223, %v226
    %vm228 = vcmp.lt.s32.totalorder %v227, 0
    %v229 = vsub.s32 0, %v227
    %v230 = vsel %vm228, %v229, %v227
    %v231 = vclz %v230
    %v232 = vsub.s32 %v231, 2
    %vm233 = vcmp.gt.s32.totalorder 0, %v232
    %v234 = vsel %vm233, 0, %v232
    %v235 = vsub.s32 32, %v234
    %v236 = vshll.u32 %v227, %v234
    %v237 = vshrl.u32 %v219, %v235
    %v238 = vor.u32 %v236, %v237
    %v239 = vsub.s32 4294967266, %v234
    %v240 = vadd.s32 %v239, 127
    %v241 = vshll.u32 %v240, 23
    %v242 = vor.u32 4788187, %v241
    %v243 = vand.u32 2147483647, %v242
    %v245 = vcvt.s32.f32 %v238
    %v246 = vmul.f32 %v245, %v243
    %v247 = vxor.u32 %v246, 2147483648
    %v248 = vsel %vm165, %v247, %v246
    %v249 = vsub.s32 4, %v225
    %v250 = vsel %vm165, %v249, %v225
    %v251 = vsel %vm164, %v58, %v248
    %v252 = vsel %vm164, 0, %v250
    %v253 = vcosq.f32.pop %v251
    %v254 = vsinq.f32.pop %v251
    %vm255 = vweird.f32 %v58
    %v256 = vadd.s32 %v252, 3
    %v257 = vand.u32 %v256, 3
    %vm258 = vcmp.lt.s32.totalorder %v257, 2
    %vm259 = vcmp.eq.s32.totalorder %v257, 0
    %v260 = vxor.u32 %v254, 2147483648
    %v261 = vsel %vm259, %v253, %v260
    %vm262 = vcmp.eq.s32.totalorder %v257, 2
    %v263 = vxor.u32 %v253, 2147483648
    %v264 = vsel %vm262, %v263, %v254
    %v265 = vsel %vm258, %v261, %v264
    %v266 = vsel %vm255, nan, %v265
    %267 = vst [vmem:[#allocation2] sm:$0xff] %v162
    %268 = vst [vmem:[#allocation2 + $0x8] sm:$0xff] %v266
    // Predicated region
    $region10: #{tpu_custom_call.1} parent=1 // pred_check
      _
    $region11: #{tpu_custom_call.1} parent=1 // pred_check_branch
      %270 = sbr.rel (0) target = $region13
    $region12: #{tpu_custom_call.1} parent=1 // pred_region
      %s272 = ssub.s32 256, 256
      %273 = vsyncadd [#allocation3], %s272
      %s274 = sshll.u32 [#allocation2], 4
      %s275 = int_to_ptr.vmem [resolvable:$true] %s274
      %280 = dma.vmem_to_hbm [thread:$0]  %s275, 256, %s2, [#allocation3], 128, 128, 8
    $region13: #{tpu_custom_call.1} parent=1 // pred_fallthru
      _
    // Predicated region
    $region14: #{tpu_custom_call.1} parent=1 // pred_check
      _
    $region15: #{tpu_custom_call.1} parent=1 // pred_check_branch
      %282 = sbr.rel (0) target = $region17
    $region16: #{tpu_custom_call.1} parent=1 // pred_region
      %283 = dma.done [#allocation3], 256
    $region17: #{tpu_custom_call.1} parent=1 // pred_fallthru
      _
    %284 = vsyncpa [#allocation3], 1

</llo_original>
